<compile_context>
chip_gen: v7x
topology: tpu7x:2x2x1
jax: 0.10.0
libtpu: 0.0.40
codegen_flags: <defaults>
</compile_context>

<pallas_src>
import math

import jax
import jax.numpy as jnp
import numpy as np
from jax import lax
from jax.experimental import pallas as pl
from jax.experimental.pallas import tpu as pltpu

_MIN_LOGITS_VALUE = -2.3819763e+38   # python float (safe to close over)
_MAX_WAVELENGTH = 10000


# -----------------------------------------------------------------------------
# In-kernel RoPE rotation helper (no MXU, no lane concatenate)
# -----------------------------------------------------------------------------
def _rope_rotate(x, head_dim):
  """Returns [x_2nd_quarter, x_1st_quarter, <junk>] along the last dim.

  Built from two lane rolls of the rope half; the two-roll *sum* form is
  direction-agnostic w.r.t. the rotate convention.  The junk in the upper half
  is multiplied by a zero sin table by the caller.  Sign of the first quarter
  is folded into the sin table.
  """
  quarter = head_dim // 4
  half = head_dim // 2
  axis = x.ndim - 1
  lane = lax.broadcasted_iota(jnp.int32, x.shape, axis)
  xr = jnp.where(lane < half, x, 0.0)               # zero the pass-through half
  return (pltpu.roll(xr, quarter, axis=axis) +
          pltpu.roll(xr, head_dim - quarter, axis=axis))


# -----------------------------------------------------------------------------
# Pallas kernels
# -----------------------------------------------------------------------------
def _make_kv_kernel(head_dim):
  """Fused K/V projection + RoPE(K) for one (batch, seq-block) tile (MQA)."""

  def kernel(x_ref, cos_ref, sin_ref, wkv_ref, kout_ref, vout_ref):
    x = x_ref[0]                                                    # (tkv, W)
    kv = jnp.dot(x, wkv_ref[...], preferred_element_type=jnp.float32)
    k = kv[:, :head_dim]                                            # (tkv, D)
    v = kv[:, head_dim:]                                            # (tkv, D)
    # RoPE(K): sign/zero pattern is folded into sin_ref; rotation is two XLU
    # rolls (no MXU permutation matmul).
    k = k * cos_ref[0] + _rope_rotate(k, head_dim) * sin_ref[0]
    kout_ref[0] = k.astype(kout_ref.dtype)
    vout_ref[0] = v.astype(vout_ref.dtype)

  return kernel


def _make_attn_kernel(num_heads, head_dim, window_size, tq, tkv, qbpt, wb,
                      nkv, approx_recip):
  """Q proj + RoPE + windowed local attention + per-head output projection.

  Grid: (batch, q_block, head, key_block).  Key blocks cover exactly
  [qi*tq - wb*tkv, qi*tq + tq); out-of-range (clamped) blocks are skipped.
  """

  def kernel(x_ref, cos_ref, sin_ref, segq_ref, segk_ref, k_ref, v_ref,
             wq_ref, wf_ref, bf_ref, out_ref,
             q_scr, m_scr, l_scr, acc_scr, out_acc):
    qi = pl.program_id(1)
    h = pl.program_id(2)
    kv = pl.program_id(3)

    # ---- per-(batch, q-block) init of the output accumulator ----
    @pl.when(jnp.logical_and(h == 0, kv == 0))
    def _():
      out_acc[...] = jnp.zeros(out_acc.shape, out_acc.dtype)

    # ---- per-(batch, q-block, head) init: Q projection + RoPE + softmax state
    @pl.when(kv == 0)
    def _():
      # 1/sqrt(head_dim) is already folded into wq in the wrapper.
      q = jnp.dot(x_ref[0], wq_ref[...],
                  preferred_element_type=jnp.float32)               # (tq, D)
      q = q * cos_ref[0] + _rope_rotate(q, head_dim) * sin_ref[0]
      q_scr[...] = q.astype(q_scr.dtype)
      m_scr[...] = jnp.full(m_scr.shape, -jnp.inf, m_scr.dtype)
      l_scr[...] = jnp.zeros(l_scr.shape, l_scr.dtype)
      acc_scr[...] = jnp.zeros(acc_scr.shape, acc_scr.dtype)

    kv_raw = qi * qbpt - wb + kv     # signed key-block index before clamping

    # ---- online softmax over this key block (skip clamped left-edge dups) ---
    @pl.when(kv_raw >= 0)
    def _():
      kb = jnp.maximum(kv_raw, 0)
      k = k_ref[0]                                                   # (tkv, D)
      v = v_ref[0]                                                   # (tkv, D)
      # Contract on head_dim directly -> no k.T relayout.
      s = lax.dot_general(q_scr[...], k, (((1,), (1,)), ((), ())),
                          preferred_element_type=jnp.float32)        # (tq,tkv)
      pos_q = qi * tq + lax.broadcasted_iota(jnp.int32, (tq, 1), 0)
      pos_k = kb * tkv + lax.broadcasted_iota(jnp.int32, (1, tkv), 1)
      mask = ((segq_ref[0] == segk_ref[0]) & (pos_q >= pos_k)
              & (pos_q <= pos_k + window_size))                      # (tq,tkv)
      s = jnp.where(mask, s, _MIN_LOGITS_VALUE)
      m_new = jnp.maximum(m_scr[...], jnp.max(s, axis=-1, keepdims=True))
      alpha = jnp.exp(m_scr[...] - m_new)
      p = jnp.exp(s - m_new)
      l_scr[...] = alpha * l_scr[...] + jnp.sum(p, axis=-1, keepdims=True)
      acc_scr[...] = alpha * acc_scr[...] + jnp.dot(
          p.astype(v.dtype), v, preferred_element_type=jnp.float32)
      m_scr[...] = m_new

    # ---- per-head finalize: normalize and project this head's slice ----
    @pl.when(kv == nkv - 1)
    def _():
      enc_h = acc_scr[...] * pl.reciprocal(l_scr[...], approx=approx_recip)
      out_acc[...] += jnp.dot(enc_h.astype(wf_ref.dtype), wf_ref[...],
                              preferred_element_type=jnp.float32)

    # ---- per-(batch, q-block) finalize: add bias, write out ----
    @pl.when(jnp.logical_and(h == num_heads - 1, kv == nkv - 1))
    def _():
      out_ref[0] = (out_acc[...] + bf_ref[...]).astype(out_ref.dtype)

  return kernel


# -----------------------------------------------------------------------------
# Glue: parameters, RoPE tables, KV-cache bookkeeping (plain JAX)
# -----------------------------------------------------------------------------
def make_params(key, width, num_heads, final_w_init_variance_scale=1.0):
  head_dim = width // num_heads
  k1, k2, k3, k4 = jax.random.split(key, 4)
  std = math.sqrt(1.0 / width)
  out_std = math.sqrt(final_w_init_variance_scale / width)
  # Linear weights stored pre-transposed as (in, out): y = x @ W.
  return dict(
      wq=jax.random.normal(k1, (width, width), jnp.float32) * std,
      wk=jax.random.normal(k2, (width, head_dim), jnp.float32) * std,
      wv=jax.random.normal(k3, (width, head_dim), jnp.float32) * std,
      wf=jax.random.normal(k4, (width, width), jnp.float32) * out_std,
      bf=jnp.zeros((1, width), jnp.float32),
  )


def _rope_tables(segment_pos, head_dim):
  """cos/sin multiplier tables (b, t, head_dim); sign/zero folded into sin."""
  b, t = segment_pos.shape
  quarter = head_dim // 4
  freq = jnp.arange(quarter, dtype=jnp.float32)
  freq_exponents = 2.0 * freq / float(head_dim // 2)
  timescale = float(_MAX_WAVELENGTH) ** freq_exponents
  sinusoid = segment_pos.astype(jnp.float32)[..., None] / timescale  # (b,t,q)
  sin = jnp.sin(sinusoid)
  cos = jnp.cos(sinusoid)
  ones = jnp.ones((b, t, head_dim // 2), jnp.float32)
  zeros = jnp.zeros((b, t, head_dim // 2), jnp.float32)
  cos_d = jnp.concatenate([cos, cos, ones], axis=-1)     # (b, t, head_dim)
  sin_d = jnp.concatenate([-sin, sin, zeros], axis=-1)   # sign folded in
  return cos_d, sin_d


def _forward_pass_mask(segment_pos, window_size):
  """Reference mask (only used by the pure-JAX reference)."""
  b, t = segment_pos.shape
  segment_ids = jnp.cumsum((segment_pos == 0).astype(jnp.int32), axis=-1)
  positions = jnp.broadcast_to(jnp.arange(t, dtype=jnp.int32)[None], (b, t))
  same = segment_ids[..., None] == segment_ids[..., None, :]
  causal = positions[..., None] >= positions[..., None, :]
  window = positions[..., None] <= positions[..., None, :] + window_size
  return same & causal & window


def _roll_per_batch(x, shifts):
  # result[:, j] = x[:, (j - shift) % w]
  w = x.shape[1]
  idx = (jnp.arange(w)[None, :] - shifts[:, None]) % w
  return jnp.take_along_axis(x, idx[:, :, None, None], axis=1)


def _right_pad(x, size, axis):
  if x.shape[axis] >= size:
    return x
  pad = [(0, 0)] * x.ndim
  pad[axis] = (0, size - x.shape[axis])
  return jnp.pad(x, pad)


def _attention_cache_from_prompt(keys, values, segment_pos, window_size):
  w = min(window_size, keys.shape[1])
  num_tokens = segment_pos[:, -1] + 1
  shifts = num_tokens % window_size
  rk = _roll_per_batch(keys[:, -w:], shifts)
  rv = _roll_per_batch(values[:, -w:], shifts)
  return dict(keys=_right_pad(rk, window_size, 1),
              values=_right_pad(rv, window_size, 1),
              num_tokens=num_tokens.astype(jnp.int32))


def _pick_tile(t, requested=None):
  if requested is not None:
    if t % requested != 0:
      raise ValueError(f"tile {requested} does not divide T={t}")
    return requested
  for cand in (512, 256, 128):
    if cand <= t and t % cand == 0:
      return cand
  return t


def _nbytes(shape, dtype):
  n = 1
  for d in shape:
    n *= int(d)
  return n * jnp.dtype(dtype).itemsize


def _vmem_limit_bytes(in_out_blocks, scratches):
  """Scoped-VMEM limit derived from actual block sizes (+ headroom)."""
  est = 2 * sum(_nbytes(s, d) for s, d in in_out_blocks)   # double buffering
  est += sum(_nbytes(s, d) for s, d in scratches)
  est = 2 * est + (4 << 20)                                 # compiler headroom
  return int(min(max(est, 16 << 20), 100 << 20))


# -----------------------------------------------------------------------------
# Wrapper calling the Pallas kernels
# -----------------------------------------------------------------------------
def local_attention_forward(x, segment_pos, params, num_heads, window_size,
                            return_cache=True, tq=None, tkv=None,
                            approx_softmax_recip=False):
  b, t, width = x.shape
  head_dim = width // num_heads
  if head_dim % 4 != 0:
    raise ValueError("head_dim must be divisible by 4 for RoPE")
  cdtype = x.dtype

  tq = _pick_tile(t, tq)
  tkv = _pick_tile(t, tkv)
  if tq % tkv != 0:
    raise ValueError("tq must be a multiple of tkv")
  if tkv % 128 != 0 and tkv != t:
    raise ValueError("tkv must be a multiple of 128 (or the full sequence)")
  qbpt = tq // tkv                       # query tile size in key blocks
  wb = -(-window_size // tkv)            # window size in key blocks (ceil)
  nkv = wb + qbpt                        # key blocks visited per query tile

  cos_d, sin_d = _rope_tables(segment_pos, head_dim)        # (b, t, D) f32
  segment_ids = jnp.cumsum((segment_pos == 0).astype(jnp.int32), axis=-1)
  seg_q = segment_ids[..., None].astype(jnp.int32)          # (b, t, 1)
  seg_k = segment_ids[:, None, :].astype(jnp.int32)         # (b, 1, t)

  # MXU operands in the compute dtype (bf16 supported); bias stays f32.
  scale = float(head_dim) ** -0.5
  wq = (params["wq"] * scale).astype(cdtype)                # scale folded in
  wkv = jnp.concatenate([params["wk"], params["wv"]], axis=-1).astype(cdtype)
  wf = params["wf"].astype(cdtype)
  bf = params["bf"].astype(jnp.float32)

  # ---- kernel A: fused K/V projection + RoPE over (batch, seq-block) ----
  vmem_a = _vmem_limit_bytes(
      [((tkv, width), cdtype), ((tkv, head_dim), jnp.float32),
       ((tkv, head_dim), jnp.float32), ((width, 2 * head_dim), cdtype),
       ((tkv, head_dim), cdtype), ((tkv, head_dim), cdtype)], [])
  k_rope, v_all = pl.pallas_call(
      _make_kv_kernel(head_dim),
      out_shape=(jax.ShapeDtypeStruct((b, t, head_dim), cdtype),
                 jax.ShapeDtypeStruct((b, t, head_dim), cdtype)),
      grid_spec=pltpu.PrefetchScalarGridSpec(
          num_scalar_prefetch=0,
          grid=(b, t // tkv),
          in_specs=[
              pl.BlockSpec((1, tkv, width), lambda bi, si: (bi, si, 0)),
              pl.BlockSpec((1, tkv, head_dim), lambda bi, si: (bi, si, 0)),
              pl.BlockSpec((1, tkv, head_dim), lambda bi, si: (bi, si, 0)),
              pl.BlockSpec((width, 2 * head_dim), lambda bi, si: (0, 0)),
          ],
          out_specs=[
              pl.BlockSpec((1, tkv, head_dim), lambda bi, si: (bi, si, 0)),
              pl.BlockSpec((1, tkv, head_dim), lambda bi, si: (bi, si, 0)),
          ]),
      compiler_params=pltpu.CompilerParams(
          dimension_semantics=("parallel", "parallel"),
          vmem_limit_bytes=vmem_a),
  )(x, cos_d, sin_d, wkv)

  # ---- kernel B: windowed local attention, grid (b, q-block, head, k-block) -
  def _q_tile_map(bi, qi, h, kv):
    return (bi, qi, 0)

  def _key_map(bi, qi, h, kv):
    return (bi, jnp.maximum(qi * qbpt - wb + kv, 0), 0)

  def _key_seg_map(bi, qi, h, kv):
    return (bi, 0, jnp.maximum(qi * qbpt - wb + kv, 0))

  vmem_b = _vmem_limit_bytes(
      [((tq, width), cdtype), ((tq, head_dim), jnp.float32),
       ((tq, head_dim), jnp.float32), ((tq, 1), jnp.int32),
       ((1, tkv), jnp.int32), ((tkv, head_dim), cdtype),
       ((tkv, head_dim), cdtype), ((width, head_dim), cdtype),
       ((head_dim, width), cdtype), ((1, width), jnp.float32),
       ((tq, width), cdtype)],
      [((tq, head_dim), cdtype), ((tq, 1), jnp.float32),
       ((tq, 1), jnp.float32), ((tq, head_dim), jnp.float32),
       ((tq, width), jnp.float32)])

  out = pl.pallas_call(
      _make_attn_kernel(num_heads, head_dim, window_size, tq, tkv, qbpt, wb,
                        nkv, approx_softmax_recip),
      out_shape=jax.ShapeDtypeStruct((b, t, width), cdtype),
      grid_spec=pltpu.PrefetchScalarGridSpec(
          num_scalar_prefetch=0,
          grid=(b, t // tq, num_heads, nkv),
          in_specs=[
              pl.BlockSpec((1, tq, width), _q_tile_map),               # x
              pl.BlockSpec((1, tq, head_dim), _q_tile_map),            # cos
              pl.BlockSpec((1, tq, head_dim), _q_tile_map),            # sin
              pl.BlockSpec((1, tq, 1), _q_tile_map),                   # seg_q
              pl.BlockSpec((1, 1, tkv), _key_seg_map),                 # seg_k
              pl.BlockSpec((1, tkv, head_dim), _key_map),              # K
              pl.BlockSpec((1, tkv, head_dim), _key_map),              # V
              pl.BlockSpec((width, head_dim),
                           lambda bi, qi, h, kv: (0, h)),              # W_q[h]
              pl.BlockSpec((head_dim, width),
                           lambda bi, qi, h, kv: (h, 0)),              # W_f[h]
              pl.BlockSpec((1, width), lambda bi, qi, h, kv: (0, 0)),  # b_f
          ],
          out_specs=pl.BlockSpec((1, tq, width), _q_tile_map),
          scratch_shapes=[
              pltpu.VMEM((tq, head_dim), cdtype),       # roped q (this head)
              pltpu.VMEM((tq, 1), jnp.float32),          # running max
              pltpu.VMEM((tq, 1), jnp.float32),          # running denominator
              pltpu.VMEM((tq, head_dim), jnp.float32),   # running PV acc
              pltpu.VMEM((tq, width), jnp.float32),      # output accumulator
          ]),
      compiler_params=pltpu.CompilerParams(
          dimension_semantics=("parallel", "parallel", "arbitrary",
                               "arbitrary"),
          vmem_limit_bytes=vmem_b),
  )(x, cos_d, sin_d, seg_q, seg_k, k_rope, v_all, wq, wf, bf)

  new_cache = None
  if return_cache:
    # TODO(synk): cache!=None decode path (_compute_cache_mask /
    # _update_attention_cache) and the roll/pad below stay in plain JAX glue.
    keys4 = k_rope.reshape(b, t, 1, head_dim)
    values4 = v_all.reshape(b, t, 1, head_dim)
    new_cache = _attention_cache_from_prompt(keys4, values4, segment_pos,
                                             window_size)
  return out, new_cache


# -----------------------------------------------------------------------------
# Pure-JAX reference (mirrors the PyTorch forward, cache=None path)
# -----------------------------------------------------------------------------
def _apply_rope_ref(inputs, positions):
  b, t = positions.shape
  x_rope, x = jnp.split(inputs, 2, axis=-1)
  pos = positions.astype(jnp.float32).reshape(b, t, 1, 1)
  freq = jnp.arange(x_rope.shape[-1] // 2, dtype=jnp.float32)
  freq_exponents = 2.0 * freq / x_rope.shape[-1]
  timescale = float(_MAX_WAVELENGTH) ** freq_exponents
  sinusoid = pos * (1.0 / timescale)
  sin = jnp.sin(sinusoid).astype(inputs.dtype)
  cos = jnp.cos(sinusoid).astype(inputs.dtype)
  first, second = jnp.split(x_rope, 2, axis=-1)
  return jnp.concatenate(
      [first * cos - second * sin, second * cos + first * sin, x], axis=-1)


def ref_forward(x, segment_pos, params, num_heads, window_size):
  b, t, width = x.shape
  hd = width // num_heads
  xf = x.astype(jnp.float32)
  q = (xf @ params["wq"]).reshape(b, t, num_heads, hd)
  k = (xf @ params["wk"]).reshape(b, t, 1, hd)
  v = (xf @ params["wv"]).reshape(b, t, 1, hd)
  q = _apply_rope_ref(q, segment_pos)
  k = _apply_rope_ref(k, segment_pos)
  mask = _forward_pass_mask(segment_pos, window_size)
  logits = jnp.einsum("btnh,bsh->bnts", q, k[:, :, 0, :]) * (hd ** -0.5)
  masked = jnp.where(mask[:, None], logits, _MIN_LOGITS_VALUE)
  probs = jax.nn.softmax(masked.astype(jnp.float32), axis=-1)
  enc = jnp.einsum("bnts,bsh->btnh", probs, v[:, :, 0, :]).reshape(b, t, width)
  out = enc @ params["wf"] + params["bf"][0]
  return out, k[:, :, 0, :], v[:, :, 0, :]


# -----------------------------------------------------------------------------
if __name__ == "__main__":
  B, T, WIDTH, NUM_HEADS, WINDOW = 2, 256, 256, 2, 128
  TQ, TKV = 128, 128   # multi q-block, multi key-block, multi-head grid

  key = jax.random.PRNGKey(0)
  kx, kp = jax.random.split(key)
  x = jax.random.normal(kx, (B, T, WIDTH), jnp.float32)
  # Batch 0: single segment; batch 1: segment reset at position 100.
  segment_pos = jnp.array(
      [list(range(T)),
       list(range(100)) + list(range(T - 100))], dtype=jnp.int32)
  params = make_params(kp, WIDTH, NUM_HEADS)

  # ---- fp32 run (tight check, exact-ish math) ----
  out, cache = local_attention_forward(x, segment_pos, params, NUM_HEADS,
                                       WINDOW, return_cache=True,
                                       tq=TQ, tkv=TKV,
                                       approx_softmax_recip=False)
  out = jax.block_until_ready(out)
  jax.block_until_ready(cache["keys"])
  jax.block_until_ready(cache["values"])
  jax.block_until_ready(cache["num_tokens"])

  ref_out, ref_k, ref_v = ref_forward(x, segment_pos, params, NUM_HEADS, WINDOW)
  np.testing.assert_allclose(np.asarray(out), np.asarray(ref_out),
                             rtol=2e-3, atol=2e-3)
  ref_cache = _attention_cache_from_prompt(
      ref_k.reshape(B, T, 1, -1), ref_v.reshape(B, T, 1, -1),
      segment_pos, WINDOW)
  np.testing.assert_allclose(np.asarray(cache["keys"]),
                             np.asarray(ref_cache["keys"]),
                             rtol=2e-3, atol=2e-3)
  np.testing.assert_allclose(np.asarray(cache["values"]),
                             np.asarray(ref_cache["values"]),
                             rtol=2e-3, atol=2e-3)
  np.testing.assert_array_equal(np.asarray(cache["num_tokens"]),
                                np.asarray(ref_cache["num_tokens"]))

  # ---- bf16 run (MXU operands bf16, fp32 accumulation; loose check) ----
  out_bf, _ = local_attention_forward(x.astype(jnp.bfloat16), segment_pos,
                                      params, NUM_HEADS, WINDOW,
                                      return_cache=False, tq=TQ, tkv=TKV,
                                      approx_softmax_recip=True)
  out_bf = jax.block_until_ready(out_bf)
  np.testing.assert_allclose(np.asarray(out_bf).astype(np.float32),
                             np.asarray(ref_out),
                             rtol=2e-1, atol=2e-1)

  print("KERNEL_OK")
</pallas_src>

<mosaic_0001>
module attributes {stable_mosaic.version = 11 : i64} {
  func.func @kernel(%arg0: i32, %arg1: i32, %arg2: memref<1x128x256xf32, #tpu.memory_space<vmem>>, %arg3: memref<1x128x128xf32, #tpu.memory_space<vmem>>, %arg4: memref<1x128x128xf32, #tpu.memory_space<vmem>>, %arg5: memref<256x256xf32, #tpu.memory_space<vmem>>, %arg6: memref<1x128x128xf32, #tpu.memory_space<vmem>>, %arg7: memref<1x128x128xf32, #tpu.memory_space<vmem>>) attributes {dimension_semantics = [#tpu.dimension_semantics<parallel>, #tpu.dimension_semantics<parallel>], iteration_bounds = array<i64: 2, 2>, scalar_prefetch = 0 : i64, scratch_operands = 0 : i64, tpu.core_type = #tpu.core_type<tc>, window_params = [{transform_indices = @transform_0, window_bounds = array<i64: 1, 128, 256>}, {transform_indices = @transform_1, window_bounds = array<i64: 1, 128, 128>}, {transform_indices = @transform_2, window_bounds = array<i64: 1, 128, 128>}, {pipeline_mode = #tpu.pipeline_mode<synchronous>, transform_indices = @transform_3, window_bounds = array<i64: 256, 256>}, {transform_indices = @transform_4, window_bounds = array<i64: 1, 128, 128>}, {transform_indices = @transform_5, window_bounds = array<i64: 1, 128, 128>}]} {
    %c0 = arith.constant 0 : index
    %c0_0 = arith.constant 0 : index
    %c0_1 = arith.constant 0 : index
    %0 = vector.load %arg2[%c0, %c0_0, %c0_1] : memref<1x128x256xf32, #tpu.memory_space<vmem>>, vector<1x128x256xf32>
    %1 = vector.shape_cast %0 : vector<1x128x256xf32> to vector<128x256xf32>
    %c0_2 = arith.constant 0 : index
    %c0_3 = arith.constant 0 : index
    %2 = vector.load %arg5[%c0_2, %c0_3] : memref<256x256xf32, #tpu.memory_space<vmem>>, vector<256x256xf32>
    %cst = arith.constant dense<0.000000e+00> : vector<128x256xf32>
    %3 = tpu.matmul %1, %2, %cst {dimension_numbers = #tpu.dot_dimension_numbers<[1], [0], [0], [1], [0, 0, 1, 1], [], []>} : vector<128x256xf32>, vector<256x256xf32>, vector<128x256xf32> -> vector<128x256xf32>
    %4 = vector.extract_strided_slice %3 {offsets = [0, 0], sizes = [128, 128], strides = [1, 1]} : vector<128x256xf32> to vector<128x128xf32>
    %5 = vector.extract_strided_slice %3 {offsets = [0, 128], sizes = [128, 128], strides = [1, 1]} : vector<128x256xf32> to vector<128x128xf32>
    %c0_4 = arith.constant 0 : index
    %c0_5 = arith.constant 0 : index
    %c0_6 = arith.constant 0 : index
    %6 = vector.load %arg3[%c0_4, %c0_5, %c0_6] : memref<1x128x128xf32, #tpu.memory_space<vmem>>, vector<1x128x128xf32>
    %7 = vector.shape_cast %6 : vector<1x128x128xf32> to vector<128x128xf32>
    %8 = arith.mulf %4, %7 : vector<128x128xf32>
    %9 = tpu.iota {dimensions = array<i32: 1>} : vector<128x128xi32>
    %c64_i32 = arith.constant 64 : i32
    %10 = vector.broadcast %c64_i32 : i32 to vector<128x128xi32>
    %11 = arith.cmpi slt, %9, %10 : vector<128x128xi32>
    %cst_7 = arith.constant 0.000000e+00 : f32
    %12 = vector.broadcast %cst_7 : f32 to vector<128x128xf32>
    %13 = arith.select %11, %4, %12 : vector<128x128xi1>, vector<128x128xf32>
    %c32_i32 = arith.constant 32 : i32
    %14 = tpu.dynamic_rotate %13 by %c32_i32 dim 1 : vector<128x128xf32>, i32 -> vector<128x128xf32>
    %c96_i32 = arith.constant 96 : i32
    %15 = tpu.dynamic_rotate %13 by %c96_i32 dim 1 : vector<128x128xf32>, i32 -> vector<128x128xf32>
    %16 = arith.addf %14, %15 : vector<128x128xf32>
    %c0_8 = arith.constant 0 : index
    %c0_9 = arith.constant 0 : index
    %c0_10 = arith.constant 0 : index
    %17 = vector.load %arg4[%c0_8, %c0_9, %c0_10] : memref<1x128x128xf32, #tpu.memory_space<vmem>>, vector<1x128x128xf32>
    %18 = vector.shape_cast %17 : vector<1x128x128xf32> to vector<128x128xf32>
    %19 = arith.mulf %16, %18 : vector<128x128xf32>
    %20 = arith.addf %8, %19 : vector<128x128xf32>
    %c0_11 = arith.constant 0 : index
    %c0_12 = arith.constant 0 : index
    %c0_13 = arith.constant 0 : index
    %21 = vector.load %arg6[%c0_11, %c0_12, %c0_13] : memref<1x128x128xf32, #tpu.memory_space<vmem>>, vector<1x128x128xf32>
    %22 = vector.shape_cast %21 : vector<1x128x128xf32> to vector<128x128xf32>
    %23 = vector.shape_cast %20 : vector<128x128xf32> to vector<1x128x128xf32>
    tpu.vector_store %arg6[%c0_11, %c0_12, %c0_13], %23 {strides = array<i32>} : memref<1x128x128xf32, #tpu.memory_space<vmem>>, vector<1x128x128xf32>,
    %c0_14 = arith.constant 0 : index
    %c0_15 = arith.constant 0 : index
    %c0_16 = arith.constant 0 : index
    %24 = vector.load %arg7[%c0_14, %c0_15, %c0_16] : memref<1x128x128xf32, #tpu.memory_space<vmem>>, vector<1x128x128xf32>
    %25 = vector.shape_cast %24 : vector<1x128x128xf32> to vector<128x128xf32>
    %26 = vector.shape_cast %5 : vector<128x128xf32> to vector<1x128x128xf32>
    tpu.vector_store %arg7[%c0_14, %c0_15, %c0_16], %26 {strides = array<i32>} : memref<1x128x128xf32, #tpu.memory_space<vmem>>, vector<1x128x128xf32>,
    return
  }
  func.func @transform_0(%arg0: i32, %arg1: i32) -> (i32, i32, i32) {
    %c0_i32 = arith.constant 0 : i32
    %c0_i32_0 = arith.constant 0 : i32
    return %arg0, %arg1, %c0_i32 : i32, i32, i32
  }
  func.func @transform_1(%arg0: i32, %arg1: i32) -> (i32, i32, i32) {
    %c0_i32 = arith.constant 0 : i32
    %c0_i32_0 = arith.constant 0 : i32
    return %arg0, %arg1, %c0_i32 : i32, i32, i32
  }
  func.func @transform_2(%arg0: i32, %arg1: i32) -> (i32, i32, i32) {
    %c0_i32 = arith.constant 0 : i32
    %c0_i32_0 = arith.constant 0 : i32
    return %arg0, %arg1, %c0_i32 : i32, i32, i32
  }
  func.func @transform_3(%arg0: i32, %arg1: i32) -> (i32, i32) {
    %c0_i32 = arith.constant 0 : i32
    %c0_i32_0 = arith.constant 0 : i32
    %c0_i32_1 = arith.constant 0 : i32
    return %c0_i32, %c0_i32_0 : i32, i32
  }
  func.func @transform_4(%arg0: i32, %arg1: i32) -> (i32, i32, i32) {
    %c0_i32 = arith.constant 0 : i32
    %c0_i32_0 = arith.constant 0 : i32
    return %arg0, %arg1, %c0_i32 : i32, i32, i32
  }
  func.func @transform_5(%arg0: i32, %arg1: i32) -> (i32, i32, i32) {
    %c0_i32 = arith.constant 0 : i32
    %c0_i32_0 = arith.constant 0 : i32
    return %arg0, %arg1, %c0_i32 : i32, i32, i32
  }
}

</mosaic_0001>

<llo_original>
// kernel: tpu_custom_call.1
$region0: #{tpu_custom_call.1}
  #allocation0 [shape = 'u32[]', space=smem, size = 0x4, offset = 0x4, fixed_abs, tag = 'smem constant byte address 0x4 - core index']
  #allocation1 [shape = 'u32[144,128]{1,0:T(1,128)}', space=vmem, size = 0x12000, scoped, tag = 'internal scratch']
  %s0 = inlined_call_operand.hbm [shape: f32[2,256,256], index: 0, kind: input, shape index: {}]
  %s1 = inlined_call_operand.hbm [shape: f32[2,256,128], index: 1, kind: input, shape index: {}]
  %s2 = inlined_call_operand.hbm [shape: f32[2,256,128], index: 2, kind: input, shape index: {}]
  %s3 = inlined_call_operand.hbm [shape: f32[256,256], index: 3, kind: input, shape index: {}]
  %s4 = inlined_call_operand.hbm [shape: f32[2,256,128], index: 4, kind: output, shape index: {0}]
  %s5 = inlined_call_operand.hbm [shape: f32[2,256,128], index: 5, kind: output, shape index: {1}]
  %6 = xla_tuple %s4, %s5
  %s7 = sld [smem:[#allocation0]]
  $region73: #{tpu_custom_call.1} parent=0
    _
  %s9 = ssub.s32 1, %s7
  %s10 = scalar_select 0, %s9, %s7
  $region1: #{tpu_custom_call.1} parent=0
    #allocation2 [shape = 'u8[262144]{0}', space=vmem, size = 0x40000, scoped, tag = 'input window, operand 0']
    #allocation3 [shape = 's32[2]{0}', space=sflag, size = 0x8, scoped, tag = 'scoped memory for tpu_custom_call.1']
    #allocation4 [shape = 's32[2]{0}', space=sflag, size = 0x8, scoped, tag = 'scoped memory for tpu_custom_call.1']
    #allocation5 [shape = 'u8[131072]{0}', space=vmem, size = 0x20000, scoped, tag = 'input window, operand 1']
    #allocation6 [shape = 's32[2]{0}', space=sflag, size = 0x8, scoped, tag = 'scoped memory for tpu_custom_call.1']
    #allocation7 [shape = 'u8[131072]{0}', space=vmem, size = 0x20000, scoped, tag = 'input window, operand 2']
    #allocation8 [shape = 'u8[262144]{0}', space=vmem, size = 0x40000, scoped, tag = 'input window, operand 3, single buffered']
    #allocation9 [shape = 's32[1]{0}', space=sflag, size = 0x4, scoped, tag = 'scoped memory for tpu_custom_call.1']
    #allocation10 [shape = 'u8[131072]{0}', space=vmem, size = 0x20000, scoped, tag = 'output window, operand 0']
    #allocation11 [shape = 'u8[131072]{0}', space=vmem, size = 0x20000, scoped, tag = 'output window, operand 1']
    #allocation12 [shape = 's32[2]{0}', space=sflag, size = 0x8, scoped, tag = 'scoped memory for tpu_custom_call.1']
    %11 = vsyncpa [#allocation3], 0
    %s12 = scalar_lea.sflag [#allocation3], 1
    %13 = vsyncpa %s12, 0
    %14 = vsyncpa [#allocation6], 0
    %s15 = scalar_lea.sflag [#allocation6], 1
    %16 = vsyncpa %s15, 0
    %17 = vsyncpa [#allocation9], 0
    %18 = vsyncpa [#allocation4], 0
    %s19 = scalar_lea.sflag [#allocation4], 1
    %20 = vsyncpa %s19, 0
    %21 = vsyncpa [#allocation12], 0
    %s22 = scalar_lea.sflag [#allocation12], 1
    %23 = vsyncpa %s22, 0
    loop: start=0, step=1, limit=6
    $region2: #{tpu_custom_call.1} parent=1 // loop_pre_header
      _
    $region3: #{tpu_custom_call.1} parent=1 // loop_header
      %s25 = sphi 0, %s29
      %p26 = scmp.ge.s32.totalorder %s25, 6
      %s32 = sphi 0, %s44
      %s33 = sphi 0, %s40
      %s34 = sphi 0, %s32
      %s35 = sphi 0, %s33
      %s36 = sphi 0, %s34
      %s37 = sphi 0, %s35
      %s49 = sphi 0, %s51
      %s52 = sphi 0, %s49
      %s53 = sphi 0, %s52
      %s69 = sphi 0, %s53
      %s77 = sphi 0, %s79
      %s80 = sphi 0, %s77
      %s81 = sphi 0, %s80
      %s97 = sphi 0, %s81
      %s105 = sphi 0, %s107
      %s108 = sphi 0, %s105
      %s109 = sphi 0, %s108
      %s125 = sphi 0, %s109
      %s129 = sphi 0, %s129
      %s131 = sphi 0, %s129
      %s132 = sphi 0, %s131
      %s146 = sphi 0, %s132
      %s154 = sphi 0, %s156
      %s157 = sphi 0, %s154
      %s158 = sphi 0, %s157
      %s174 = sphi 0, %s158
      %s182 = sphi 0, %s184
      %s185 = sphi 0, %s182
      %s186 = sphi 0, %s185
      %s202 = sphi 0, %s186
    $region4: #{tpu_custom_call.1} parent=1 // loop_header_branch
      %28 = sbr.rel (%p26) target = $region8
    $region5: #{tpu_custom_call.1} parent=1 // loop_body
      %s30 = ssub.s32 %s25, 1
      %s31 = ssub.s32 %s25, 2
      %s38 = sadd.s32 1, %s33
      %p39 = scmp.ge.s32.totalorder %s38, 2
      %s40 = scalar_select %p39, 0, %s38
      %s41 = sadd.s32 1, %s32
      %s42 = scalar_select %p39, %s41, %s32
      %p43 = scmp.ge.s32.totalorder %s42, 2
      %s44 = scalar_select %p43, 0, %s42
      %s45 = ssub.s32 %s32, %s44
      %s46 = ssub.s32 %s33, %s40
      %s47 = sor.u32 %s45, %s46
      %p48 = scmp.eq.s32.totalorder %s47, 0
      %s50 = sadd.s32 %s49, 1
      %s51 = scalar_select %p48, %s49, %s50
      %p54 = pneg %p48
      %p55 = scmp.eq.s32.totalorder %s25, 3
      %p56 = por %p54, %p55
      %p57 = scmp.ne.s32.totalorder %s49, %s52
      %p58 = scmp.eq.s32.totalorder %s25, 0
      %p59 = por %p57, %p58
      %p60 = scmp.ne.s32.totalorder %s49, %s52
      %p61 = scmp.eq.s32.totalorder %s30, 3
      %p62 = por %p60, %p61
      %p63 = scmp.ne.s32.totalorder %s52, %s53
      %p64 = scmp.eq.s32.totalorder %s30, 0
      %p65 = por %p63, %p64
      %p66 = scmp.ne.s32.totalorder %s52, %s53
      %p67 = scmp.eq.s32.totalorder %s31, 3
      %p68 = por %p66, %p67
      %p70 = scmp.ne.s32.totalorder %s53, %s69
      %p71 = scmp.eq.s32.totalorder %s31, 0
      %p72 = por %p70, %p71
      %s73 = ssub.s32 %s32, %s44
      %s74 = ssub.s32 %s33, %s40
      %s75 = sor.u32 %s73, %s74
      %p76 = scmp.eq.s32.totalorder %s75, 0
      %s78 = sadd.s32 %s77, 1
      %s79 = scalar_select %p76, %s77, %s78
      %p82 = pneg %p76
      %p83 = scmp.eq.s32.totalorder %s25, 3
      %p84 = por %p82, %p83
      %p85 = scmp.ne.s32.totalorder %s77, %s80
      %p86 = scmp.eq.s32.totalorder %s25, 0
      %p87 = por %p85, %p86
      %p88 = scmp.ne.s32.totalorder %s77, %s80
      %p89 = scmp.eq.s32.totalorder %s30, 3
      %p90 = por %p88, %p89
      %p91 = scmp.ne.s32.totalorder %s80, %s81
      %p92 = scmp.eq.s32.totalorder %s30, 0
      %p93 = por %p91, %p92
      %p94 = scmp.ne.s32.totalorder %s80, %s81
      %p95 = scmp.eq.s32.totalorder %s31, 3
      %p96 = por %p94, %p95
      %p98 = scmp.ne.s32.totalorder %s81, %s97
      %p99 = scmp.eq.s32.totalorder %s31, 0
      %p100 = por %p98, %p99
      %s101 = ssub.s32 %s32, %s44
      %s102 = ssub.s32 %s33, %s40
      %s103 = sor.u32 %s101, %s102
      %p104 = scmp.eq.s32.totalorder %s103, 0
      %s106 = sadd.s32 %s105, 1
      %s107 = scalar_select %p104, %s105, %s106
      %p110 = pneg %p104
      %p111 = scmp.eq.s32.totalorder %s25, 3
      %p112 = por %p110, %p111
      %p113 = scmp.ne.s32.totalorder %s105, %s108
      %p114 = scmp.eq.s32.totalorder %s25, 0
      %p115 = por %p113, %p114
      %p116 = scmp.ne.s32.totalorder %s105, %s108
      %p117 = scmp.eq.s32.totalorder %s30, 3
      %p118 = por %p116, %p117
      %p119 = scmp.ne.s32.totalorder %s108, %s109
      %p120 = scmp.eq.s32.totalorder %s30, 0
      %p121 = por %p119, %p120
      %p122 = scmp.ne.s32.totalorder %s108, %s109
      %p123 = scmp.eq.s32.totalorder %s31, 3
      %p124 = por %p122, %p123
      %p126 = scmp.ne.s32.totalorder %s109, %s125
      %p127 = scmp.eq.s32.totalorder %s31, 0
      %p128 = por %p126, %p127
      %s130 = sadd.s32 %s129, 1
      %p133 = scmp.eq.s32.totalorder %s25, 3
      %p134 = scmp.ne.s32.totalorder %s129, %s131
      %p135 = scmp.eq.s32.totalorder %s25, 0
      %p136 = por %p134, %p135
      %p137 = scmp.ne.s32.totalorder %s129, %s131
      %p138 = scmp.eq.s32.totalorder %s30, 3
      %p139 = por %p137, %p138
      %p140 = scmp.ne.s32.totalorder %s131, %s132
      %p141 = scmp.eq.s32.totalorder %s30, 0
      %p142 = por %p140, %p141
      %p143 = scmp.ne.s32.totalorder %s131, %s132
      %p144 = scmp.eq.s32.totalorder %s31, 3
      %p145 = por %p143, %p144
      %p147 = scmp.ne.s32.totalorder %s132, %s146
      %p148 = scmp.eq.s32.totalorder %s31, 0
      %p149 = por %p147, %p148
      %s150 = ssub.s32 %s32, %s44
      %s151 = ssub.s32 %s33, %s40
      %s152 = sor.u32 %s150, %s151
      %p153 = scmp.eq.s32.totalorder %s152, 0
      %s155 = sadd.s32 %s154, 1
      %s156 = scalar_select %p153, %s154, %s155
      %p159 = pneg %p153
      %p160 = scmp.eq.s32.totalorder %s25, 3
      %p161 = por %p159, %p160
      %p162 = scmp.ne.s32.totalorder %s154, %s157
      %p163 = scmp.eq.s32.totalorder %s25, 0
      %p164 = por %p162, %p163
      %p165 = scmp.ne.s32.totalorder %s154, %s157
      %p166 = scmp.eq.s32.totalorder %s30, 3
      %p167 = por %p165, %p166
      %p168 = scmp.ne.s32.totalorder %s157, %s158
      %p169 = scmp.eq.s32.totalorder %s30, 0
      %p170 = por %p168, %p169
      %p171 = scmp.ne.s32.totalorder %s157, %s158
      %p172 = scmp.eq.s32.totalorder %s31, 3
      %p173 = por %p171, %p172
      %p175 = scmp.ne.s32.totalorder %s158, %s174
      %p176 = scmp.eq.s32.totalorder %s31, 0
      %p177 = por %p175, %p176
      %s178 = ssub.s32 %s32, %s44
      %s179 = ssub.s32 %s33, %s40
      %s180 = sor.u32 %s178, %s179
      %p181 = scmp.eq.s32.totalorder %s180, 0
      %s183 = sadd.s32 %s182, 1
      %s184 = scalar_select %p181, %s182, %s183
      %p187 = pneg %p181
      %p188 = scmp.eq.s32.totalorder %s25, 3
      %p189 = por %p187, %p188
      %p190 = scmp.ne.s32.totalorder %s182, %s185
      %p191 = scmp.eq.s32.totalorder %s25, 0
      %p192 = por %p190, %p191
      %p193 = scmp.ne.s32.totalorder %s182, %s185
      %p194 = scmp.eq.s32.totalorder %s30, 3
      %p195 = por %p193, %p194
      %p196 = scmp.ne.s32.totalorder %s185, %s186
      %p197 = scmp.eq.s32.totalorder %s30, 0
      %p198 = por %p196, %p197
      %p199 = scmp.ne.s32.totalorder %s185, %s186
      %p200 = scmp.eq.s32.totalorder %s31, 3
      %p201 = por %p199, %p200
      %p203 = scmp.ne.s32.totalorder %s186, %s202
      %p204 = scmp.eq.s32.totalorder %s31, 0
      %p205 = por %p203, %p204
      %p206 = scmp.le.s32.totalorder 1, %s25
      %p207 = scmp.lt.s32.totalorder %s25, 5
      %p208 = pnand %p206, %p207
      %p209 = pneg %p208
      // Predicated region
      $region9: #{tpu_custom_call.1} parent=5 // pred_check
        _
      $region10: #{tpu_custom_call.1} parent=5 // pred_check_branch
        %211 = sbr.rel (%p208) target = $region12
      $region11: #{tpu_custom_call.1} parent=5 // pred_region
        %s212 = ssub.s32 %s25, 1
        // Predicated region
        $region13: #{tpu_custom_call.1} parent=11 // pred_check
          %p213 = pneg %p142
        $region14: #{tpu_custom_call.1} parent=11 // pred_check_branch
          %215 = sbr.rel (%p213) target = $region16
        $region15: #{tpu_custom_call.1} parent=11 // pred_region
          %s217 = ssub.s32 8192, 8192
          %218 = vsyncadd [#allocation9], %s217
          %s219 = sshll.u32 [#allocation8], 4
          %s220 = int_to_ptr.vmem [resolvable:$true] %s219
          %225 = dma.hbm_to_vmem [thread:$0]  %s3, 8192, %s220, [#allocation9], 256, 256, 16
        $region16: #{tpu_custom_call.1} parent=11 // pred_fallthru
          _
      $region12: #{tpu_custom_call.1} parent=5 // pred_fallthru
        _
      %p226 = scmp.lt.s32.totalorder %s25, 4
      // Predicated region
      $region17: #{tpu_custom_call.1} parent=5 // pred_check
        %p227 = pneg %p226
      $region18: #{tpu_custom_call.1} parent=5 // pred_check_branch
        %229 = sbr.rel (%p227) target = $region20
      $region19: #{tpu_custom_call.1} parent=5 // pred_region
        // Predicated region
        $region21: #{tpu_custom_call.1} parent=19 // pred_check
          %p230 = pneg %p59
        $region22: #{tpu_custom_call.1} parent=19 // pred_check_branch
          %232 = sbr.rel (%p230) target = $region24
        $region23: #{tpu_custom_call.1} parent=19 // pred_region
          %s233 = sand.u32 %s49, 1
          %s234 = scalar_lea.sflag [#allocation3], %s233
          %s235 = sand.u32 %s49, 1
          %s236 = smul.addr %s235, 256
          %s237 = scalar_lea.vmem [#allocation2], %s236
          %s238 = smul.u32 16, %s33
          %s240 = ssub.s32 4096, 4096
          %241 = vsyncadd %s234, %s240
          %s242 = smul.addr %s238, 2
          %s243 = smul.addr %s32, 64
          %s244 = sadd.s32 %s242, %s243
          %s245 = smul.addr %s244, 128
          %s246 = scalar_lea.hbm %s0, %s245
          %s247 = sshll.u32 %s237, 4
          %s248 = int_to_ptr.vmem [resolvable:$true] %s247
          %253 = dma.hbm_to_vmem [thread:$0]  %s246, 4096, %s248, %s234, 256, 256, 16
        $region24: #{tpu_custom_call.1} parent=19 // pred_fallthru
          _
        // Predicated region
        $region25: #{tpu_custom_call.1} parent=19 // pred_check
          %p254 = pneg %p87
        $region26: #{tpu_custom_call.1} parent=19 // pred_check_branch
          %256 = sbr.rel (%p254) target = $region28
        $region27: #{tpu_custom_call.1} parent=19 // pred_region
          %s257 = sand.u32 %s25, 1
          %s258 = scalar_lea.sflag [#allocation6], %s257
          %s259 = sand.u32 %s77, 1
          %s260 = smul.addr %s259, 128
          %s261 = scalar_lea.vmem [#allocation5], %s260
          %s262 = smul.u32 16, %s33
          %s264 = ssub.s32 2048, 2048
          %265 = vsyncadd %s258, %s264
          %s266 = smul.addr %s32, 32
          %s267 = sadd.s32 %s262, %s266
          %s268 = smul.addr %s267, 128
          %s269 = scalar_lea.hbm %s1, %s268
          %s270 = sshll.u32 %s261, 4
          %s271 = int_to_ptr.vmem [resolvable:$true] %s270
          %276 = dma.hbm_to_vmem [thread:$0]  %s269, 2048, %s271, %s258, 128, 128, 8
        $region28: #{tpu_custom_call.1} parent=19 // pred_fallthru
          _
        // Predicated region
        $region29: #{tpu_custom_call.1} parent=19 // pred_check
          %p277 = pneg %p115
        $region30: #{tpu_custom_call.1} parent=19 // pred_check_branch
          %279 = sbr.rel (%p277) target = $region32
        $region31: #{tpu_custom_call.1} parent=19 // pred_region
          %s280 = sand.u32 %s25, 1
          %s281 = scalar_lea.sflag [#allocation6], %s280
          %s282 = sand.u32 %s105, 1
          %s283 = smul.addr %s282, 128
          %s284 = scalar_lea.vmem [#allocation7], %s283
          %s285 = smul.u32 16, %s33
          %s287 = ssub.s32 2048, 2048
          %288 = vsyncadd %s281, %s287
          %s289 = smul.addr %s32, 32
          %s290 = sadd.s32 %s285, %s289
          %s291 = smul.addr %s290, 128
          %s292 = scalar_lea.hbm %s2, %s291
          %s293 = sshll.u32 %s284, 4
          %s294 = int_to_ptr.vmem [resolvable:$true] %s293
          %299 = dma.hbm_to_vmem [thread:$0]  %s292, 2048, %s294, %s281, 128, 128, 8
        $region32: #{tpu_custom_call.1} parent=19 // pred_fallthru
          _
      $region20: #{tpu_custom_call.1} parent=5 // pred_fallthru
        _
      %p300 = scmp.le.s32.totalorder 1, %s25
      %p301 = scmp.lt.s32.totalorder %s25, 5
      %p302 = pnand %p300, %p301
      %p303 = pneg %p302
      // Predicated region
      $region33: #{tpu_custom_call.1} parent=5 // pred_check
        _
      $region34: #{tpu_custom_call.1} parent=5 // pred_check_branch
        %305 = sbr.rel (%p302) target = $region36
      $region35: #{tpu_custom_call.1} parent=5 // pred_region
        %s306 = ssub.s32 %s25, 1
        %s307 = sand.u32 %s52, 1
        %s308 = scalar_lea.sflag [#allocation3], %s307
        %s309 = sand.u32 %s52, 1
        %s310 = smul.addr %s309, 256
        %s311 = scalar_lea.vmem [#allocation2], %s310
        // Predicated region
        $region37: #{tpu_custom_call.1} parent=35 // pred_check
          %p312 = pneg %p65
        $region38: #{tpu_custom_call.1} parent=35 // pred_check_branch
          %314 = sbr.rel (%p312) target = $region40
        $region39: #{tpu_custom_call.1} parent=35 // pred_region
          %315 = dma.done %s308, 4096
        $region40: #{tpu_custom_call.1} parent=35 // pred_fallthru
          _
        %s316 = sand.u32 %s30, 1
        %s317 = scalar_lea.sflag [#allocation6], %s316
        %s318 = sand.u32 %s80, 1
        %s319 = smul.addr %s318, 128
        %s320 = scalar_lea.vmem [#allocation5], %s319
        // Predicated region
        $region41: #{tpu_custom_call.1} parent=35 // pred_check
          %p321 = pneg %p93
        $region42: #{tpu_custom_call.1} parent=35 // pred_check_branch
          %323 = sbr.rel (%p321) target = $region44
        $region43: #{tpu_custom_call.1} parent=35 // pred_region
          %324 = dma.done %s317, 2048
        $region44: #{tpu_custom_call.1} parent=35 // pred_fallthru
          _
        %s325 = sand.u32 %s30, 1
        %s326 = scalar_lea.sflag [#allocation6], %s325
        %s327 = sand.u32 %s108, 1
        %s328 = smul.addr %s327, 128
        %s329 = scalar_lea.vmem [#allocation7], %s328
        // Predicated region
        $region45: #{tpu_custom_call.1} parent=35 // pred_check
          %p330 = pneg %p121
        $region46: #{tpu_custom_call.1} parent=35 // pred_check_branch
          %332 = sbr.rel (%p330) target = $region48
        $region47: #{tpu_custom_call.1} parent=35 // pred_region
          %333 = dma.done %s326, 2048
        $region48: #{tpu_custom_call.1} parent=35 // pred_fallthru
          _
        // Predicated region
        $region49: #{tpu_custom_call.1} parent=35 // pred_check
          %p334 = pneg %p142
        $region50: #{tpu_custom_call.1} parent=35 // pred_check_branch
          %336 = sbr.rel (%p334) target = $region52
        $region51: #{tpu_custom_call.1} parent=35 // pred_region
          %337 = dma.done [#allocation9], 8192
        $region52: #{tpu_custom_call.1} parent=35 // pred_fallthru
          _
        %s338 = sand.u32 %s52, 1
        %s339 = scalar_lea.sflag [#allocation3], %s338
        %s340 = sand.u32 %s52, 1
        %s341 = smul.addr %s340, 256
        %s342 = scalar_lea.vmem [#allocation2], %s341
        %p343 = pneg %p65
        %p344 = pneg %p62
        %s345 = sand.u32 %s30, 1
        %s346 = scalar_lea.sflag [#allocation6], %s345
        %s347 = sand.u32 %s80, 1
        %s348 = smul.addr %s347, 128
        %s349 = scalar_lea.vmem [#allocation5], %s348
        %p350 = pneg %p93
        %p351 = pneg %p90
        %s352 = sand.u32 %s30, 1
        %s353 = scalar_lea.sflag [#allocation6], %s352
        %s354 = sand.u32 %s108, 1
        %s355 = smul.addr %s354, 128
        %s356 = scalar_lea.vmem [#allocation7], %s355
        %p357 = pneg %p121
        %p358 = pneg %p118
        %p359 = pneg %p142
        %p360 = pneg %p139
        %p361 = pneg %p170
        %p362 = pneg %p167
        %s363 = sand.u32 %s157, 1
        %s364 = scalar_lea.sflag [#allocation4], %s363
        %s365 = sand.u32 %s157, 1
        %s366 = smul.addr %s365, 128
        %s367 = scalar_lea.vmem [#allocation10], %s366
        %p368 = pneg %p198
        %p369 = pneg %p195
        %s370 = sand.u32 %s185, 1
        %s371 = scalar_lea.sflag [#allocation12], %s370
        %s372 = sand.u32 %s185, 1
        %s373 = smul.addr %s372, 128
        %s374 = scalar_lea.vmem [#allocation11], %s373
        %s375 = smul.u32 16, %s35
        %s376 = smul.u32 16, %s35
        %s377 = smul.u32 16, %s35
        %s378 = smul.u32 16, %s35
        %s379 = smul.u32 16, %s35
        %v380 = vld [vmem:[%s311] sm:$0xff]
        %v381 = vld [vmem:[%s311 + $0x8] sm:$0xff]
        %v382 = vld [vmem:[%s311 + $0x10] sm:$0xff]
        %v383 = vld [vmem:[%s311 + $0x18] sm:$0xff]
        %v384 = vld [vmem:[%s311 + $0x20] sm:$0xff]
        %v385 = vld [vmem:[%s311 + $0x28] sm:$0xff]
        %v386 = vld [vmem:[%s311 + $0x30] sm:$0xff]
        %v387 = vld [vmem:[%s311 + $0x38] sm:$0xff]
        %v388 = vld [vmem:[%s311 + $0x40] sm:$0xff]
        %v389 = vld [vmem:[%s311 + $0x48] sm:$0xff]
        %v390 = vld [vmem:[%s311 + $0x50] sm:$0xff]
        %v391 = vld [vmem:[%s311 + $0x58] sm:$0xff]
        %v392 = vld [vmem:[%s311 + $0x60] sm:$0xff]
        %v393 = vld [vmem:[%s311 + $0x68] sm:$0xff]
        %v394 = vld [vmem:[%s311 + $0x70] sm:$0xff]
        %v395 = vld [vmem:[%s311 + $0x78] sm:$0xff]
        %v396 = vld [vmem:[%s311 + $0x80] sm:$0xff]
        %v397 = vld [vmem:[%s311 + $0x88] sm:$0xff]
        %v398 = vld [vmem:[%s311 + $0x90] sm:$0xff]
        %v399 = vld [vmem:[%s311 + $0x98] sm:$0xff]
        %v400 = vld [vmem:[%s311 + $0xa0] sm:$0xff]
        %v401 = vld [vmem:[%s311 + $0xa8] sm:$0xff]
        %v402 = vld [vmem:[%s311 + $0xb0] sm:$0xff]
        %v403 = vld [vmem:[%s311 + $0xb8] sm:$0xff]
        %v404 = vld [vmem:[%s311 + $0xc0] sm:$0xff]
        %v405 = vld [vmem:[%s311 + $0xc8] sm:$0xff]
        %v406 = vld [vmem:[%s311 + $0xd0] sm:$0xff]
        %v407 = vld [vmem:[%s311 + $0xd8] sm:$0xff]
        %v408 = vld [vmem:[%s311 + $0xe0] sm:$0xff]
        %v409 = vld [vmem:[%s311 + $0xe8] sm:$0xff]
        %v410 = vld [vmem:[%s311 + $0xf0] sm:$0xff]
        %v411 = vld [vmem:[%s311 + $0xf8] sm:$0xff]
        %v412 = vld [vmem:[#allocation8] sm:$0xff]
        %v413 = vld [vmem:[#allocation8 + $0x8] sm:$0xff]
        %v414 = vld [vmem:[#allocation8 + $0x10] sm:$0xff]
        %v415 = vld [vmem:[#allocation8 + $0x18] sm:$0xff]
        %v416 = vld [vmem:[#allocation8 + $0x20] sm:$0xff]
        %v417 = vld [vmem:[#allocation8 + $0x28] sm:$0xff]
        %v418 = vld [vmem:[#allocation8 + $0x30] sm:$0xff]
        %v419 = vld [vmem:[#allocation8 + $0x38] sm:$0xff]
        %v420 = vld [vmem:[#allocation8 + $0x40] sm:$0xff]
        %v421 = vld [vmem:[#allocation8 + $0x48] sm:$0xff]
        %v422 = vld [vmem:[#allocation8 + $0x50] sm:$0xff]
        %v423 = vld [vmem:[#allocation8 + $0x58] sm:$0xff]
        %v424 = vld [vmem:[#allocation8 + $0x60] sm:$0xff]
        %v425 = vld [vmem:[#allocation8 + $0x68] sm:$0xff]
        %v426 = vld [vmem:[#allocation8 + $0x70] sm:$0xff]
        %v427 = vld [vmem:[#allocation8 + $0x78] sm:$0xff]
        %v428 = vld [vmem:[#allocation8 + $0x80] sm:$0xff]
        %v429 = vld [vmem:[#allocation8 + $0x88] sm:$0xff]
        %v430 = vld [vmem:[#allocation8 + $0x90] sm:$0xff]
        %v431 = vld [vmem:[#allocation8 + $0x98] sm:$0xff]
        %v432 = vld [vmem:[#allocation8 + $0xa0] sm:$0xff]
        %v433 = vld [vmem:[#allocation8 + $0xa8] sm:$0xff]
        %v434 = vld [vmem:[#allocation8 + $0xb0] sm:$0xff]
        %v435 = vld [vmem:[#allocation8 + $0xb8] sm:$0xff]
        %v436 = vld [vmem:[#allocation8 + $0xc0] sm:$0xff]
        %v437 = vld [vmem:[#allocation8 + $0xc8] sm:$0xff]
        %v438 = vld [vmem:[#allocation8 + $0xd0] sm:$0xff]
        %v439 = vld [vmem:[#allocation8 + $0xd8] sm:$0xff]
        %v440 = vld [vmem:[#allocation8 + $0xe0] sm:$0xff]
        %v441 = vld [vmem:[#allocation8 + $0xe8] sm:$0xff]
        %v442 = vld [vmem:[#allocation8 + $0xf0] sm:$0xff]
        %v443 = vld [vmem:[#allocation8 + $0xf8] sm:$0xff]
        %v444 = vld [vmem:[#allocation8 + $0x100] sm:$0xff]
        %v445 = vld [vmem:[#allocation8 + $0x108] sm:$0xff]
        %v446 = vld [vmem:[#allocation8 + $0x110] sm:$0xff]
        %v447 = vld [vmem:[#allocation8 + $0x118] sm:$0xff]
        %v448 = vld [vmem:[#allocation8 + $0x120] sm:$0xff]
        %v449 = vld [vmem:[#allocation8 + $0x128] sm:$0xff]
        %v450 = vld [vmem:[#allocation8 + $0x130] sm:$0xff]
        %v451 = vld [vmem:[#allocation8 + $0x138] sm:$0xff]
        %v452 = vld [vmem:[#allocation8 + $0x140] sm:$0xff]
        %v453 = vld [vmem:[#allocation8 + $0x148] sm:$0xff]
        %v454 = vld [vmem:[#allocation8 + $0x150] sm:$0xff]
        %v455 = vld [vmem:[#allocation8 + $0x158] sm:$0xff]
        %v456 = vld [vmem:[#allocation8 + $0x160] sm:$0xff]
        %v457 = vld [vmem:[#allocation8 + $0x168] sm:$0xff]
        %v458 = vld [vmem:[#allocation8 + $0x170] sm:$0xff]
        %v459 = vld [vmem:[#allocation8 + $0x178] sm:$0xff]
        %v460 = vld [vmem:[#allocation8 + $0x180] sm:$0xff]
        %v461 = vld [vmem:[#allocation8 + $0x188] sm:$0xff]
        %v462 = vld [vmem:[#allocation8 + $0x190] sm:$0xff]
        %v463 = vld [vmem:[#allocation8 + $0x198] sm:$0xff]
        %v464 = vld [vmem:[#allocation8 + $0x1a0] sm:$0xff]
        %v465 = vld [vmem:[#allocation8 + $0x1a8] sm:$0xff]
        %v466 = vld [vmem:[#allocation8 + $0x1b0] sm:$0xff]
        %v467 = vld [vmem:[#allocation8 + $0x1b8] sm:$0xff]
        %v468 = vld [vmem:[#allocation8 + $0x1c0] sm:$0xff]
        %v469 = vld [vmem:[#allocation8 + $0x1c8] sm:$0xff]
        %v470 = vld [vmem:[#allocation8 + $0x1d0] sm:$0xff]
        %v471 = vld [vmem:[#allocation8 + $0x1d8] sm:$0xff]
        %v472 = vld [vmem:[#allocation8 + $0x1e0] sm:$0xff]
        %v473 = vld [vmem:[#allocation8 + $0x1e8] sm:$0xff]
        %v474 = vld [vmem:[#allocation8 + $0x1f0] sm:$0xff]
        %v475 = vld [vmem:[#allocation8 + $0x1f8] sm:$0xff]
        %476 = vmatprep.subr.mxu0 %v413
        %477 = vmatpush1.msra.mxu0 %v412
        %478 = vmatprep.subr.mxu0 %v415
        %479 = vmatpush1.msra.mxu0 %v414
        %480 = vmatprep.subr.mxu0 %v417
        %481 = vmatpush1.msra.mxu0 %v416
        %482 = vmatprep.subr.mxu0 %v419
        %483 = vmatpush1.msra.mxu0 %v418
        %484 = vmatprep.subr.mxu0 %v421
        %485 = vmatpush1.msra.mxu0 %v420
        %486 = vmatprep.subr.mxu0 %v423
        %487 = vmatpush1.msra.mxu0 %v422
        %488 = vmatprep.subr.mxu0 %v425
        %489 = vmatpush1.msra.mxu0 %v424
        %490 = vmatprep.subr.mxu0 %v427
        %491 = vmatpush1.msra.mxu0 %v426
        %492 = vmatprep.subr.mxu0 %v429
        %493 = vmatpush1.msra.mxu0 %v428
        %494 = vmatprep.subr.mxu0 %v431
        %495 = vmatpush1.msra.mxu0 %v430
        %496 = vmatprep.subr.mxu0 %v433
        %497 = vmatpush1.msra.mxu0 %v432
        %498 = vmatprep.subr.mxu0 %v435
        %499 = vmatpush1.msra.mxu0 %v434
        %500 = vmatprep.subr.mxu0 %v437
        %501 = vmatpush1.msra.mxu0 %v436
        %502 = vmatprep.subr.mxu0 %v439
        %503 = vmatpush1.msra.mxu0 %v438
        %504 = vmatprep.subr.mxu0 %v441
        %505 = vmatpush1.msra.mxu0 %v440
        %506 = vmatprep.subr.mxu0 %v443
        %507 = vmatpush1.msra.mxu0 %v442
        %508 = vmatprep.subr.mxu0 %v445
        %509 = vmatpush1.msra.mxu0 %v444
        %510 = vmatprep.subr.mxu0 %v447
        %511 = vmatpush1.msra.mxu0 %v446
        %512 = vmatprep.subr.mxu0 %v449
        %513 = vmatpush1.msra.mxu0 %v448
        %514 = vmatprep.subr.mxu0 %v451
        %515 = vmatpush1.msra.mxu0 %v450
        %516 = vmatprep.subr.mxu0 %v453
        %517 = vmatpush1.msra.mxu0 %v452
        %518 = vmatprep.subr.mxu0 %v455
        %519 = vmatpush1.msra.mxu0 %v454
        %520 = vmatprep.subr.mxu0 %v457
        %521 = vmatpush1.msra.mxu0 %v456
        %522 = vmatprep.subr.mxu0 %v459
        %523 = vmatpush1.msra.mxu0 %v458
        %524 = vmatprep.subr.mxu0 %v461
        %525 = vmatpush1.msra.mxu0 %v460
        %526 = vmatprep.subr.mxu0 %v463
        %527 = vmatpush1.msra.mxu0 %v462
        %528 = vmatprep.subr.mxu0 %v465
        %529 = vmatpush1.msra.mxu0 %v464
        %530 = vmatprep.subr.mxu0 %v467
        %531 = vmatpush1.msra.mxu0 %v466
        %532 = vmatprep.subr.mxu0 %v469
        %533 = vmatpush1.msra.mxu0 %v468
        %534 = vmatprep.subr.mxu0 %v471
        %535 = vmatpush1.msra.mxu0 %v470
        %536 = vmatprep.subr.mxu0 %v473
        %537 = vmatpush1.msra.mxu0 %v472
        %538 = vmatprep.subr.mxu0 %v475
        %539 = vmatpush1.msra.mxu0 %v474
        %540 = vmatprep.mubr.f32.mxu0 %v381
        %541 = vmatmul.mubr.f32.gmra.mrb[0].mxu0 %v380
        %v542 = vpop.f32.mrb[0].mxu0
        %v543 = vadd.f32 0.0, %v542
        %v544 = vpop.f32.mrb[0].mxu0
        %v545 = vadd.f32 0.0, %v544
        %546 = vmatprep.mubr.f32.mxu0 %v383
        %547 = vmatmul.mubr.f32.gmra.mrb[0].mxu0 %v382
        %v548 = vpop.f32.mrb[0].mxu0
        %v549 = vadd.f32 0.0, %v548
        %v550 = vpop.f32.mrb[0].mxu0
        %v551 = vadd.f32 0.0, %v550
        %552 = vmatprep.mubr.f32.mxu0 %v385
        %553 = vmatmul.mubr.f32.gmra.mrb[0].mxu0 %v384
        %v554 = vpop.f32.mrb[0].mxu0
        %v555 = vadd.f32 0.0, %v554
        %v556 = vpop.f32.mrb[0].mxu0
        %v557 = vadd.f32 0.0, %v556
        %558 = vmatprep.mubr.f32.mxu0 %v387
        %559 = vmatmul.mubr.f32.gmra.mrb[0].mxu0 %v386
        %v560 = vpop.f32.mrb[0].mxu0
        %v561 = vadd.f32 0.0, %v560
        %v562 = vpop.f32.mrb[0].mxu0
        %v563 = vadd.f32 0.0, %v562
        %564 = vmatprep.mubr.f32.mxu0 %v389
        %565 = vmatmul.mubr.f32.gmra.mrb[0].mxu0 %v388
        %v566 = vpop.f32.mrb[0].mxu0
        %v567 = vadd.f32 0.0, %v566
        %v568 = vpop.f32.mrb[0].mxu0
        %v569 = vadd.f32 0.0, %v568
        %570 = vmatprep.mubr.f32.mxu0 %v391
        %571 = vmatmul.mubr.f32.gmra.mrb[0].mxu0 %v390
        %v572 = vpop.f32.mrb[0].mxu0
        %v573 = vadd.f32 0.0, %v572
        %v574 = vpop.f32.mrb[0].mxu0
        %v575 = vadd.f32 0.0, %v574
        %576 = vmatprep.mubr.f32.mxu0 %v393
        %577 = vmatmul.mubr.f32.gmra.mrb[0].mxu0 %v392
        %v578 = vpop.f32.mrb[0].mxu0
        %v579 = vadd.f32 0.0, %v578
        %v580 = vpop.f32.mrb[0].mxu0
        %v581 = vadd.f32 0.0, %v580
        %582 = vmatprep.mubr.f32.mxu0 %v395
        %583 = vmatmul.mubr.f32.gmra.mrb[0].mxu0 %v394
        %v584 = vpop.f32.mrb[0].mxu0
        %v585 = vadd.f32 0.0, %v584
        %v586 = vpop.f32.mrb[0].mxu0
        %v587 = vadd.f32 0.0, %v586
        %588 = vmatprep.mubr.f32.mxu0 %v397
        %589 = vmatmul.mubr.f32.gmra.mrb[0].mxu0 %v396
        %v590 = vpop.f32.mrb[0].mxu0
        %v591 = vadd.f32 0.0, %v590
        %v592 = vpop.f32.mrb[0].mxu0
        %v593 = vadd.f32 0.0, %v592
        %594 = vmatprep.mubr.f32.mxu0 %v399
        %595 = vmatmul.mubr.f32.gmra.mrb[0].mxu0 %v398
        %v596 = vpop.f32.mrb[0].mxu0
        %v597 = vadd.f32 0.0, %v596
        %v598 = vpop.f32.mrb[0].mxu0
        %v599 = vadd.f32 0.0, %v598
        %600 = vmatprep.mubr.f32.mxu0 %v401
        %601 = vmatmul.mubr.f32.gmra.mrb[0].mxu0 %v400
        %v602 = vpop.f32.mrb[0].mxu0
        %v603 = vadd.f32 0.0, %v602
        %v604 = vpop.f32.mrb[0].mxu0
        %v605 = vadd.f32 0.0, %v604
        %606 = vmatprep.mubr.f32.mxu0 %v403
        %607 = vmatmul.mubr.f32.gmra.mrb[0].mxu0 %v402
        %v608 = vpop.f32.mrb[0].mxu0
        %v609 = vadd.f32 0.0, %v608
        %v610 = vpop.f32.mrb[0].mxu0
        %v611 = vadd.f32 0.0, %v610
        %612 = vmatprep.mubr.f32.mxu0 %v405
        %613 = vmatmul.mubr.f32.gmra.mrb[0].mxu0 %v404
        %v614 = vpop.f32.mrb[0].mxu0
        %v615 = vadd.f32 0.0, %v614
        %v616 = vpop.f32.mrb[0].mxu0
        %v617 = vadd.f32 0.0, %v616
        %618 = vmatprep.mubr.f32.mxu0 %v407
        %619 = vmatmul.mubr.f32.gmra.mrb[0].mxu0 %v406
        %v620 = vpop.f32.mrb[0].mxu0
        %v621 = vadd.f32 0.0, %v620
        %v622 = vpop.f32.mrb[0].mxu0
        %v623 = vadd.f32 0.0, %v622
        %624 = vmatprep.mubr.f32.mxu0 %v409
        %625 = vmatmul.mubr.f32.gmra.mrb[0].mxu0 %v408
        %v626 = vpop.f32.mrb[0].mxu0
        %v627 = vadd.f32 0.0, %v626
        %v628 = vpop.f32.mrb[0].mxu0
        %v629 = vadd.f32 0.0, %v628
        %630 = vmatprep.mubr.f32.mxu0 %v411
        %631 = vmatmul.mubr.f32.gmra.mrb[0].mxu0 %v410
        %v632 = vpop.f32.mrb[0].mxu0
        %v633 = vadd.f32 0.0, %v632
        %v634 = vpop.f32.mrb[0].mxu0
        %v635 = vadd.f32 0.0, %v634
        %636 = vdwg.mxu0
        %v637 = vld [vmem:[%s320] sm:$0xff]
        %v638 = vld [vmem:[%s320 + $0x8] sm:$0xff]
        %v639 = vld [vmem:[%s320 + $0x10] sm:$0xff]
        %v640 = vld [vmem:[%s320 + $0x18] sm:$0xff]
        %v641 = vld [vmem:[%s320 + $0x20] sm:$0xff]
        %v642 = vld [vmem:[%s320 + $0x28] sm:$0xff]
        %v643 = vld [vmem:[%s320 + $0x30] sm:$0xff]
        %v644 = vld [vmem:[%s320 + $0x38] sm:$0xff]
        %v645 = vld [vmem:[%s320 + $0x40] sm:$0xff]
        %v646 = vld [vmem:[%s320 + $0x48] sm:$0xff]
        %v647 = vld [vmem:[%s320 + $0x50] sm:$0xff]
        %v648 = vld [vmem:[%s320 + $0x58] sm:$0xff]
        %v649 = vld [vmem:[%s320 + $0x60] sm:$0xff]
        %v650 = vld [vmem:[%s320 + $0x68] sm:$0xff]
        %v651 = vld [vmem:[%s320 + $0x70] sm:$0xff]
        %v652 = vld [vmem:[%s320 + $0x78] sm:$0xff]
        %v653 = vmul.f32 %v543, %v637
        %v654 = vmul.f32 %v549, %v638
        %v655 = vmul.f32 %v555, %v639
        %v656 = vmul.f32 %v561, %v640
        %v657 = vmul.f32 %v567, %v641
        %v658 = vmul.f32 %v573, %v642
        %v659 = vmul.f32 %v579, %v643
        %v660 = vmul.f32 %v585, %v644
        %v661 = vmul.f32 %v591, %v645
        %v662 = vmul.f32 %v597, %v646
        %v663 = vmul.f32 %v603, %v647
        %v664 = vmul.f32 %v609, %v648
        %v665 = vmul.f32 %v615, %v649
        %v666 = vmul.f32 %v621, %v650
        %v667 = vmul.f32 %v627, %v651
        %v668 = vmul.f32 %v633, %v652
        %v669 = vlaneseq
        %v670 = vand.u32 %v669, 127
        %vm671 = vcmp.lt.s32.totalorder %v670, 64
        %v672 = vsel %vm671, %v543, 0.0
        %v673 = vsel %vm671, %v549, 0.0
        %v674 = vsel %vm671, %v555, 0.0
        %v675 = vsel %vm671, %v561, 0.0
        %v676 = vsel %vm671, %v567, 0.0
        %v677 = vsel %vm671, %v573, 0.0
        %v678 = vsel %vm671, %v579, 0.0
        %v679 = vsel %vm671, %v585, 0.0
        %v680 = vsel %vm671, %v591, 0.0
        %v681 = vsel %vm671, %v597, 0.0
        %v682 = vsel %vm671, %v603, 0.0
        %v683 = vsel %vm671, %v609, 0.0
        %v684 = vsel %vm671, %v615, 0.0
        %v685 = vsel %vm671, %v621, 0.0
        %v686 = vsel %vm671, %v627, 0.0
        %v687 = vsel %vm671, %v633, 0.0
        %688 = vrot.lane.b32.xlu0 %v672, 32
        %v689 = vpop.permute.xlu0 %688
        %690 = vrot.lane.b32.xlu0 %v673, 32
        %v691 = vpop.permute.xlu0 %690
        %692 = vrot.lane.b32.xlu0 %v674, 32
        %v693 = vpop.permute.xlu0 %692
        %694 = vrot.lane.b32.xlu0 %v675, 32
        %v695 = vpop.permute.xlu0 %694
        %696 = vrot.lane.b32.xlu0 %v676, 32
        %v697 = vpop.permute.xlu0 %696
        %698 = vrot.lane.b32.xlu0 %v677, 32
        %v699 = vpop.permute.xlu0 %698
        %700 = vrot.lane.b32.xlu0 %v678, 32
        %v701 = vpop.permute.xlu0 %700
        %702 = vrot.lane.b32.xlu0 %v679, 32
        %v703 = vpop.permute.xlu0 %702
        %704 = vrot.lane.b32.xlu0 %v680, 32
        %v705 = vpop.permute.xlu0 %704
        %706 = vrot.lane.b32.xlu0 %v681, 32
        %v707 = vpop.permute.xlu0 %706
        %708 = vrot.lane.b32.xlu0 %v682, 32
        %v709 = vpop.permute.xlu0 %708
        %710 = vrot.lane.b32.xlu0 %v683, 32
        %v711 = vpop.permute.xlu0 %710
        %712 = vrot.lane.b32.xlu0 %v684, 32
        %v713 = vpop.permute.xlu0 %712
        %714 = vrot.lane.b32.xlu0 %v685, 32
        %v715 = vpop.permute.xlu0 %714
        %716 = vrot.lane.b32.xlu0 %v686, 32
        %v717 = vpop.permute.xlu0 %716
        %718 = vrot.lane.b32.xlu0 %v687, 32
        %v719 = vpop.permute.xlu0 %718
        %720 = vrot.lane.b32.xlu0 %v672, 96
        %v721 = vpop.permute.xlu0 %720
        %722 = vrot.lane.b32.xlu0 %v673, 96
        %v723 = vpop.permute.xlu0 %722
        %724 = vrot.lane.b32.xlu0 %v674, 96
        %v725 = vpop.permute.xlu0 %724
        %726 = vrot.lane.b32.xlu0 %v675, 96
        %v727 = vpop.permute.xlu0 %726
        %728 = vrot.lane.b32.xlu0 %v676, 96
        %v729 = vpop.permute.xlu0 %728
        %730 = vrot.lane.b32.xlu0 %v677, 96
        %v731 = vpop.permute.xlu0 %730
        %732 = vrot.lane.b32.xlu0 %v678, 96
        %v733 = vpop.permute.xlu0 %732
        %734 = vrot.lane.b32.xlu0 %v679, 96
        %v735 = vpop.permute.xlu0 %734
        %736 = vrot.lane.b32.xlu0 %v680, 96
        %v737 = vpop.permute.xlu0 %736
        %738 = vrot.lane.b32.xlu0 %v681, 96
        %v739 = vpop.permute.xlu0 %738
        %740 = vrot.lane.b32.xlu0 %v682, 96
        %v741 = vpop.permute.xlu0 %740
        %742 = vrot.lane.b32.xlu0 %v683, 96
        %v743 = vpop.permute.xlu0 %742
        %744 = vrot.lane.b32.xlu0 %v684, 96
        %v745 = vpop.permute.xlu0 %744
        %746 = vrot.lane.b32.xlu0 %v685, 96
        %v747 = vpop.permute.xlu0 %746
        %748 = vrot.lane.b32.xlu0 %v686, 96
        %v749 = vpop.permute.xlu0 %748
        %750 = vrot.lane.b32.xlu0 %v687, 96
        %v751 = vpop.permute.xlu0 %750
        %v752 = vadd.f32 %v689, %v721
        %v753 = vadd.f32 %v691, %v723
        %v754 = vadd.f32 %v693, %v725
        %v755 = vadd.f32 %v695, %v727
        %v756 = vadd.f32 %v697, %v729
        %v757 = vadd.f32 %v699, %v731
        %v758 = vadd.f32 %v701, %v733
        %v759 = vadd.f32 %v703, %v735
        %v760 = vadd.f32 %v705, %v737
        %v761 = vadd.f32 %v707, %v739
        %v762 = vadd.f32 %v709, %v741
        %v763 = vadd.f32 %v711, %v743
        %v764 = vadd.f32 %v713, %v745
        %v765 = vadd.f32 %v715, %v747
        %v766 = vadd.f32 %v717, %v749
        %v767 = vadd.f32 %v719, %v751
        %v768 = vld [vmem:[%s329] sm:$0xff]
        %v769 = vld [vmem:[%s329 + $0x8] sm:$0xff]
        %v770 = vld [vmem:[%s329 + $0x10] sm:$0xff]
        %v771 = vld [vmem:[%s329 + $0x18] sm:$0xff]
        %v772 = vld [vmem:[%s329 + $0x20] sm:$0xff]
        %v773 = vld [vmem:[%s329 + $0x28] sm:$0xff]
        %v774 = vld [vmem:[%s329 + $0x30] sm:$0xff]
        %v775 = vld [vmem:[%s329 + $0x38] sm:$0xff]
        %v776 = vld [vmem:[%s329 + $0x40] sm:$0xff]
        %v777 = vld [vmem:[%s329 + $0x48] sm:$0xff]
        %v778 = vld [vmem:[%s329 + $0x50] sm:$0xff]
        %v779 = vld [vmem:[%s329 + $0x58] sm:$0xff]
        %v780 = vld [vmem:[%s329 + $0x60] sm:$0xff]
        %v781 = vld [vmem:[%s329 + $0x68] sm:$0xff]
        %v782 = vld [vmem:[%s329 + $0x70] sm:$0xff]
        %v783 = vld [vmem:[%s329 + $0x78] sm:$0xff]
        %v784 = vmul.f32 %v752, %v768
        %v785 = vmul.f32 %v753, %v769
        %v786 = vmul.f32 %v754, %v770
        %v787 = vmul.f32 %v755, %v771
        %v788 = vmul.f32 %v756, %v772
        %v789 = vmul.f32 %v757, %v773
        %v790 = vmul.f32 %v758, %v774
        %v791 = vmul.f32 %v759, %v775
        %v792 = vmul.f32 %v760, %v776
        %v793 = vmul.f32 %v761, %v777
        %v794 = vmul.f32 %v762, %v778
        %v795 = vmul.f32 %v763, %v779
        %v796 = vmul.f32 %v764, %v780
        %v797 = vmul.f32 %v765, %v781
        %v798 = vmul.f32 %v766, %v782
        %v799 = vmul.f32 %v767, %v783
        %v800 = vadd.f32 %v653, %v784
        %v801 = vadd.f32 %v654, %v785
        %v802 = vadd.f32 %v655, %v786
        %v803 = vadd.f32 %v656, %v787
        %v804 = vadd.f32 %v657, %v788
        %v805 = vadd.f32 %v658, %v789
        %v806 = vadd.f32 %v659, %v790
        %v807 = vadd.f32 %v660, %v791
        %v808 = vadd.f32 %v661, %v792
        %v809 = vadd.f32 %v662, %v793
        %v810 = vadd.f32 %v663, %v794
        %v811 = vadd.f32 %v664, %v795
        %v812 = vadd.f32 %v665, %v796
        %v813 = vadd.f32 %v666, %v797
        %v814 = vadd.f32 %v667, %v798
        %v815 = vadd.f32 %v668, %v799
        %816 = vst [vmem:[%s367] sm:$0xff] %v800
        %817 = vst [vmem:[%s367 + $0x8] sm:$0xff] %v801
        %818 = vst [vmem:[%s367 + $0x10] sm:$0xff] %v802
        %819 = vst [vmem:[%s367 + $0x18] sm:$0xff] %v803
        %820 = vst [vmem:[%s367 + $0x20] sm:$0xff] %v804
        %821 = vst [vmem:[%s367 + $0x28] sm:$0xff] %v805
        %822 = vst [vmem:[%s367 + $0x30] sm:$0xff] %v806
        %823 = vst [vmem:[%s367 + $0x38] sm:$0xff] %v807
        %824 = vst [vmem:[%s367 + $0x40] sm:$0xff] %v808
        %825 = vst [vmem:[%s367 + $0x48] sm:$0xff] %v809
        %826 = vst [vmem:[%s367 + $0x50] sm:$0xff] %v810
        %827 = vst [vmem:[%s367 + $0x58] sm:$0xff] %v811
        %828 = vst [vmem:[%s367 + $0x60] sm:$0xff] %v812
        %829 = vst [vmem:[%s367 + $0x68] sm:$0xff] %v813
        %830 = vst [vmem:[%s367 + $0x70] sm:$0xff] %v814
        %831 = vst [vmem:[%s367 + $0x78] sm:$0xff] %v815
        %832 = vst [vmem:[%s374] sm:$0xff] %v545
        %833 = vst [vmem:[%s374 + $0x8] sm:$0xff] %v551
        %834 = vst [vmem:[%s374 + $0x10] sm:$0xff] %v557
        %835 = vst [vmem:[%s374 + $0x18] sm:$0xff] %v563
        %836 = vst [vmem:[%s374 + $0x20] sm:$0xff] %v569
        %837 = vst [vmem:[%s374 + $0x28] sm:$0xff] %v575
        %838 = vst [vmem:[%s374 + $0x30] sm:$0xff] %v581
        %839 = vst [vmem:[%s374 + $0x38] sm:$0xff] %v587
        %840 = vst [vmem:[%s374 + $0x40] sm:$0xff] %v593
        %841 = vst [vmem:[%s374 + $0x48] sm:$0xff] %v599
        %842 = vst [vmem:[%s374 + $0x50] sm:$0xff] %v605
        %843 = vst [vmem:[%s374 + $0x58] sm:$0xff] %v611
        %844 = vst [vmem:[%s374 + $0x60] sm:$0xff] %v617
        %845 = vst [vmem:[%s374 + $0x68] sm:$0xff] %v623
        %846 = vst [vmem:[%s374 + $0x70] sm:$0xff] %v629
        %847 = vst [vmem:[%s374 + $0x78] sm:$0xff] %v635
        %s848 = sand.u32 %s157, 1
        %s849 = scalar_lea.sflag [#allocation4], %s848
        %s850 = sand.u32 %s157, 1
        %s851 = smul.addr %s850, 128
        %s852 = scalar_lea.vmem [#allocation10], %s851
        %s853 = sand.u32 %s185, 1
        %s854 = scalar_lea.sflag [#allocation12], %s853
        %s855 = sand.u32 %s185, 1
        %s856 = smul.addr %s855, 128
        %s857 = scalar_lea.vmem [#allocation11], %s856
        // Predicated region
        $region53: #{tpu_custom_call.1} parent=35 // pred_check
          %p858 = pneg %p167
        $region54: #{tpu_custom_call.1} parent=35 // pred_check_branch
          %860 = sbr.rel (%p858) target = $region56
        $region55: #{tpu_custom_call.1} parent=35 // pred_region
          %s861 = smul.u32 16, %s35
          %s863 = ssub.s32 2048, 2048
          %864 = vsyncadd %s849, %s863
          %s865 = smul.addr %s34, 32
          %s866 = sadd.s32 %s861, %s865
          %s867 = smul.addr %s866, 128
          %s868 = scalar_lea.hbm %s4, %s867
          %s869 = sshll.u32 %s852, 4
          %s870 = int_to_ptr.vmem [resolvable:$true] %s869
          %875 = dma.vmem_to_hbm [thread:$0]  %s870, 2048, %s868, %s849, 128, 128, 8
        $region56: #{tpu_custom_call.1} parent=35 // pred_fallthru
          _
        // Predicated region
        $region57: #{tpu_custom_call.1} parent=35 // pred_check
          %p876 = pneg %p195
        $region58: #{tpu_custom_call.1} parent=35 // pred_check_branch
          %878 = sbr.rel (%p876) target = $region60
        $region59: #{tpu_custom_call.1} parent=35 // pred_region
          %s879 = smul.u32 16, %s35
          %s881 = ssub.s32 2048, 2048
          %882 = vsyncadd %s854, %s881
          %s883 = smul.addr %s34, 32
          %s884 = sadd.s32 %s879, %s883
          %s885 = smul.addr %s884, 128
          %s886 = scalar_lea.hbm %s5, %s885
          %s887 = sshll.u32 %s857, 4
          %s888 = int_to_ptr.vmem [resolvable:$true] %s887
          %893 = dma.vmem_to_hbm [thread:$0]  %s888, 2048, %s886, %s854, 128, 128, 8
        $region60: #{tpu_custom_call.1} parent=35 // pred_fallthru
          _
      $region36: #{tpu_custom_call.1} parent=5 // pred_fallthru
        _
      %p894 = scmp.le.s32.totalorder 2, %s25
      // Predicated region
      $region61: #{tpu_custom_call.1} parent=5 // pred_check
        %p895 = pneg %p894
      $region62: #{tpu_custom_call.1} parent=5 // pred_check_branch
        %897 = sbr.rel (%p895) target = $region64
      $region63: #{tpu_custom_call.1} parent=5 // pred_region
        %s898 = ssub.s32 %s25, 2
        // Predicated region
        $region65: #{tpu_custom_call.1} parent=63 // pred_check
          %p899 = pneg %p173
        $region66: #{tpu_custom_call.1} parent=63 // pred_check_branch
          %901 = sbr.rel (%p899) target = $region68
        $region67: #{tpu_custom_call.1} parent=63 // pred_region
          %s902 = sand.u32 %s158, 1
          %s903 = scalar_lea.sflag [#allocation4], %s902
          %s904 = sand.u32 %s158, 1
          %s905 = smul.addr %s904, 128
          %s906 = scalar_lea.vmem [#allocation10], %s905
          %907 = dma.done %s903, 2048
        $region68: #{tpu_custom_call.1} parent=63 // pred_fallthru
          _
        // Predicated region
        $region69: #{tpu_custom_call.1} parent=63 // pred_check
          %p908 = pneg %p201
        $region70: #{tpu_custom_call.1} parent=63 // pred_check_branch
          %910 = sbr.rel (%p908) target = $region72
        $region71: #{tpu_custom_call.1} parent=63 // pred_region
          %s911 = sand.u32 %s186, 1
          %s912 = scalar_lea.sflag [#allocation12], %s911
          %s913 = sand.u32 %s186, 1
          %s914 = smul.addr %s913, 128
          %s915 = scalar_lea.vmem [#allocation11], %s914
          %916 = dma.done %s912, 2048
        $region72: #{tpu_custom_call.1} parent=63 // pred_fallthru
          _
      $region64: #{tpu_custom_call.1} parent=5 // pred_fallthru
        _
    $region6: #{tpu_custom_call.1} parent=1 // loop_footer
      %s29 = sadd.s32 1, %s25
    $region7: #{tpu_custom_call.1} parent=1 // loop_footer_branch
      %24 = sbr.rel target = $region3
    $region8: #{tpu_custom_call.1} parent=1 // loop_exit
      _
    %917 = vsyncpa [#allocation3], 1
    %s918 = scalar_lea.sflag [#allocation3], 1
    %919 = vsyncpa %s918, 1
    %920 = vsyncpa [#allocation6], 1
    %s921 = scalar_lea.sflag [#allocation6], 1
    %922 = vsyncpa %s921, 1
    %923 = vsyncpa [#allocation9], 1
    %924 = vsyncpa [#allocation4], 1
    %s925 = scalar_lea.sflag [#allocation4], 1
    %926 = vsyncpa %s925, 1
    %927 = vsyncpa [#allocation12], 1
    %s928 = scalar_lea.sflag [#allocation12], 1
    %929 = vsyncpa %s928, 1

</llo_original>
